<compile_context>
chip_gen: v7x
topology: tpu7x:2x2x1
jax: 0.10.0
libtpu: 0.0.40
codegen_flags: <defaults>
</compile_context>

<pallas_src>
import functools

import jax
import jax.numpy as jnp
from jax.experimental import pallas as pl
from jax.experimental.pallas import tpu as pltpu


def _round_up(x, m):
    return ((x + m - 1) // m) * m


def _testblock_kernel(x_ref, w_ref, b_ref, o_ref):
    # x_ref: (tile_m, tile_k) f32   activation tile
    # w_ref: (tile_k, tile_n) bf16  pre-transposed, pre-padded weight tile
    # b_ref: (1, tile_n)      f32   bias row
    # o_ref: (tile_m, tile_n) f32   output tile; VMEM-resident across the K
    #                               axis and used directly as the accumulator
    k = pl.program_id(2)

    # Fold bias into the accumulator init -> epilogue is just ReLU + store.
    @pl.when(k == 0)
    def _():
        o_ref[...] = jnp.broadcast_to(b_ref[...], o_ref.shape)

    # bf16 MXU inputs, f32 accumulation.
    o_ref[...] += jnp.dot(
        x_ref[...].astype(jnp.bfloat16),
        w_ref[...],
        preferred_element_type=jnp.float32,
    )

    @pl.when(k == pl.num_programs(2) - 1)
    def _():
        o_ref[...] = jnp.maximum(o_ref[...], 0.0)


def prepare_params(weight, bias):
    """One-time (per-parameter) prep, hoisted out of the per-call forward.

    Pads to 128-multiples, transposes the weight to (K_pad, N_pad) so the
    kernel dot is a plain (m,k)x(k,n) contraction, and stores it as bf16 so
    the weight DMA moves half the bytes.
    """
    N, K = weight.shape
    assert bias.shape == (N,)
    K_pad = _round_up(K, 128)
    N_pad = _round_up(N, 128)
    w_t = jnp.pad(weight, ((0, N_pad - N), (0, K_pad - K))).T.astype(jnp.bfloat16)
    b_row = jnp.pad(bias, (0, N_pad - N)).reshape(1, N_pad).astype(jnp.float32)
    return w_t, b_row


def _choose_tiles(M, K_pad, N_pad):
    # tile_m: adaptive split (avoids up-to-2x padded compute on awkward M).
    if M <= 512:
        tile_m = _round_up(M, 8)
    else:
        n_i = -(-M // 512)
        tile_m = _round_up(-(-M // n_i), 8)
    M_pad = _round_up(M, tile_m)
    grid_i = M_pad // tile_m

    # tile_n: up to 512 (lane-dense stores, fewer x re-reads).
    tile_n = 128
    for cand in (512, 256):
        if N_pad % cand == 0:
            tile_n = cand
            break
    # v7x megacore: with a single i block, make sure the parallel j axis has
    # >= 2 blocks so both TensorCores get work (neutral on v5e/v6e).
    if grid_i == 1:
        while tile_n > 128 and N_pad // tile_n < 2:
            tile_n //= 2

    # tile_k: up to 1024 when divisible (fewer grid steps -> less per-step
    # overhead and fewer accumulator revisits).
    tile_k = 128
    for cand in (1024, 512, 256):
        if K_pad % cand == 0:
            tile_k = cand
            break

    return tile_m, M_pad, tile_n, tile_k


@functools.partial(jax.jit, static_argnames=("out_size",))
def testblock_forward(x, w_t, b_row, *, out_size):
    """y = relu(x @ W^T + b) with W pre-prepared by prepare_params."""
    M, K = x.shape
    K_pad, N_pad = w_t.shape
    assert K <= K_pad and out_size <= N_pad

    tile_m, M_pad, tile_n, tile_k = _choose_tiles(M, K_pad, N_pad)
    grid = (M_pad // tile_m, N_pad // tile_n, K_pad // tile_k)
    grid_i, grid_j, grid_k = grid

    # Only the (dynamic) activation is padded per call; padding the static
    # weight/bias per call would add a full weight-sized HBM round trip.
    x_p = jnp.pad(x, ((0, M_pad - M), (0, K_pad - K)))

    # Double-buffered VMEM footprint; cap vmem limit at 48 MiB (v7x-safe).
    footprint = (2 * tile_m * tile_k * 4      # x tiles (f32)
                 + 2 * tile_k * tile_n * 2    # weight tiles (bf16)
                 + 2 * tile_m * tile_n * 4    # output tiles (f32)
                 + 2 * tile_n * 4)            # bias
    vmem_limit = min(48 * 1024 * 1024, max(32 * 1024 * 1024, 2 * footprint))

    cost = pl.CostEstimate(
        flops=2 * M_pad * N_pad * K_pad,
        # Actual tiled traffic: x is re-read once per j block, W once per i
        # block (W is bf16 = 2 bytes), plus bias and the output writeback.
        bytes_accessed=(grid_j * M_pad * K_pad * 4
                        + grid_i * K_pad * N_pad * 2
                        + N_pad * 4
                        + M_pad * N_pad * 4),
        transcendentals=0,
    )

    out_padded = pl.pallas_call(
        _testblock_kernel,
        out_shape=jax.ShapeDtypeStruct((M_pad, N_pad), jnp.float32),
        grid_spec=pltpu.PrefetchScalarGridSpec(
            num_scalar_prefetch=0,
            grid=grid,
            in_specs=[
                pl.BlockSpec((tile_m, tile_k), lambda i, j, k: (i, k)),   # x
                # TODO(synk): add pipeline_mode=pl.Buffered(3) on the weight
                # spec if profiling shows exposed weight DMA after the bf16
                # MXU speedup.
                pl.BlockSpec((tile_k, tile_n), lambda i, j, k: (k, j)),   # W^T (bf16)
                pl.BlockSpec((1, tile_n),      lambda i, j, k: (0, j)),   # bias
            ],
            out_specs=pl.BlockSpec((tile_m, tile_n), lambda i, j, k: (i, j)),
        ),
        compiler_params=pltpu.CompilerParams(
            dimension_semantics=("parallel", "parallel", "arbitrary"),
            vmem_limit_bytes=vmem_limit,
        ),
        cost_estimate=cost,
    )(x_p, w_t, b_row)

    return out_padded[:M, :out_size]


if __name__ == "__main__":
    key = jax.random.PRNGKey(0)
    k_x, k_w, k_b = jax.random.split(key, 3)

    batch, in_size, out_size = 8, 32, 32

    x = jax.random.normal(k_x, (batch, in_size), dtype=jnp.float32)
    # Deterministic param init (mimics nn.Linear uniform(-1/sqrt(in), 1/sqrt(in)))
    bound = 1.0 / jnp.sqrt(jnp.float32(in_size))
    weight = jax.random.uniform(k_w, (out_size, in_size), jnp.float32, -bound, bound)
    bias = jax.random.uniform(k_b, (out_size,), jnp.float32, -bound, bound)

    # One-time parameter prep (pad + transpose + bf16), outside the jitted forward.
    w_t, b_row = prepare_params(weight, bias)

    y = testblock_forward(x, w_t, b_row, out_size=out_size)
    y = jax.block_until_ready(y)

    # Reference check in plain JAX (bf16 MXU inputs, f32 accumulation ->
    # relaxed tolerance vs the pure-f32 reference).
    y_ref = jnp.maximum(x @ weight.T + bias, 0.0)
    assert y.shape == y_ref.shape, "shape mismatch vs reference"
    assert jnp.allclose(y, y_ref, atol=2e-2, rtol=2e-2), "mismatch vs reference"

    print("KERNEL_OK")
</pallas_src>

<mosaic_0001>
module attributes {stable_mosaic.version = 11 : i64} {
  func.func @_testblock_kernel(%arg0: i32, %arg1: i32, %arg2: i32, %arg3: memref<8x128xf32, #tpu.memory_space<vmem>>, %arg4: memref<128x128xbf16, #tpu.memory_space<vmem>>, %arg5: memref<1x128xf32, #tpu.memory_space<vmem>>, %arg6: memref<8x128xf32, #tpu.memory_space<vmem>>) attributes {dimension_semantics = [#tpu.dimension_semantics<parallel>, #tpu.dimension_semantics<parallel>, #tpu.dimension_semantics<arbitrary>], iteration_bounds = array<i64: 1, 1, 1>, scalar_prefetch = 0 : i64, scratch_operands = 0 : i64, tpu.core_type = #tpu.core_type<tc>, window_params = [{transform_indices = @transform_0, window_bounds = array<i64: 8, 128>}, {transform_indices = @transform_1, window_bounds = array<i64: 128, 128>}, {transform_indices = @transform_2, window_bounds = array<i64: 1, 128>}, {transform_indices = @transform_3, window_bounds = array<i64: 8, 128>}]} {
    %c0_i32 = arith.constant 0 : i32
    %0 = arith.cmpi eq, %arg2, %c0_i32 : i32
    %1 = arith.extui %0 : i1 to i32
    %c0_i32_0 = arith.constant 0 : i32
    %2 = arith.cmpi ne, %1, %c0_i32_0 : i32
    scf.if %2 {
      %c0_10 = arith.constant 0 : index
      %c0_11 = arith.constant 0 : index
      %13 = vector.load %arg5[%c0_10, %c0_11] : memref<1x128xf32, #tpu.memory_space<vmem>>, vector<1x128xf32>
      %14 = vector.shape_cast %13 : vector<1x128xf32> to vector<1x128xf32>
      %15 = vector.broadcast %14 : vector<1x128xf32> to vector<8x128xf32>
      %c0_12 = arith.constant 0 : index
      %c0_13 = arith.constant 0 : index
      %16 = vector.load %arg6[%c0_12, %c0_13] : memref<8x128xf32, #tpu.memory_space<vmem>>, vector<8x128xf32>
      tpu.vector_store %arg6[%c0_12, %c0_13], %15 {strides = array<i32>} : memref<8x128xf32, #tpu.memory_space<vmem>>, vector<8x128xf32>,
    } else {
    }
    %c0 = arith.constant 0 : index
    %c0_1 = arith.constant 0 : index
    %3 = vector.load %arg6[%c0, %c0_1] : memref<8x128xf32, #tpu.memory_space<vmem>>, vector<8x128xf32>
    %c0_2 = arith.constant 0 : index
    %c0_3 = arith.constant 0 : index
    %4 = vector.load %arg3[%c0_2, %c0_3] : memref<8x128xf32, #tpu.memory_space<vmem>>, vector<8x128xf32>
    %5 = arith.truncf %4 : vector<8x128xf32> to vector<8x128xbf16>
    %c0_4 = arith.constant 0 : index
    %c0_5 = arith.constant 0 : index
    %6 = vector.load %arg4[%c0_4, %c0_5] : memref<128x128xbf16, #tpu.memory_space<vmem>>, vector<128x128xbf16>
    %cst = arith.constant dense<0.000000e+00> : vector<8x128xf32>
    %7 = tpu.matmul %5, %6, %cst {dimension_numbers = #tpu.dot_dimension_numbers<[1], [0], [0], [1], [0, 0, 1, 1], [], []>} : vector<8x128xbf16>, vector<128x128xbf16>, vector<8x128xf32> -> vector<8x128xf32>
    %8 = arith.addf %3, %7 : vector<8x128xf32>
    %c0_6 = arith.constant 0 : index
    %c0_7 = arith.constant 0 : index
    %9 = vector.load %arg6[%c0_6, %c0_7] : memref<8x128xf32, #tpu.memory_space<vmem>>, vector<8x128xf32>
    tpu.vector_store %arg6[%c0_6, %c0_7], %8 {strides = array<i32>} : memref<8x128xf32, #tpu.memory_space<vmem>>, vector<8x128xf32>,
    %c0_i32_8 = arith.constant 0 : i32
    %10 = arith.cmpi eq, %arg2, %c0_i32_8 : i32
    %11 = arith.extui %10 : i1 to i32
    %c0_i32_9 = arith.constant 0 : i32
    %12 = arith.cmpi ne, %11, %c0_i32_9 : i32
    scf.if %12 {
      %c0_10 = arith.constant 0 : index
      %c0_11 = arith.constant 0 : index
      %13 = vector.load %arg6[%c0_10, %c0_11] : memref<8x128xf32, #tpu.memory_space<vmem>>, vector<8x128xf32>
      %cst_12 = arith.constant 0.000000e+00 : f32
      %14 = vector.broadcast %cst_12 : f32 to vector<8x128xf32>
      %15 = arith.maximumf %13, %14 : vector<8x128xf32>
      %c0_13 = arith.constant 0 : index
      %c0_14 = arith.constant 0 : index
      %16 = vector.load %arg6[%c0_13, %c0_14] : memref<8x128xf32, #tpu.memory_space<vmem>>, vector<8x128xf32>
      tpu.vector_store %arg6[%c0_13, %c0_14], %15 {strides = array<i32>} : memref<8x128xf32, #tpu.memory_space<vmem>>, vector<8x128xf32>,
    } else {
    }
    return
  }
  func.func @transform_0(%arg0: i32, %arg1: i32, %arg2: i32) -> (i32, i32) {
    %c0_i32 = arith.constant 0 : i32
    return %arg0, %arg2 : i32, i32
  }
  func.func @transform_1(%arg0: i32, %arg1: i32, %arg2: i32) -> (i32, i32) {
    %c0_i32 = arith.constant 0 : i32
    return %arg2, %arg1 : i32, i32
  }
  func.func @transform_2(%arg0: i32, %arg1: i32, %arg2: i32) -> (i32, i32) {
    %c0_i32 = arith.constant 0 : i32
    %c0_i32_0 = arith.constant 0 : i32
    return %c0_i32, %arg1 : i32, i32
  }
  func.func @transform_3(%arg0: i32, %arg1: i32, %arg2: i32) -> (i32, i32) {
    %c0_i32 = arith.constant 0 : i32
    return %arg0, %arg1 : i32, i32
  }
}

</mosaic_0001>

<llo_original>
// kernel: testblock_forward.1
$region0: #{testblock_forward.1}
  #allocation0 [shape = 'u32[]', space=smem, size = 0x4, offset = 0x4, fixed_abs, tag = 'smem constant byte address 0x4 - core index']
  #allocation1 [shape = 'u32[144,128]{1,0:T(1,128)}', space=vmem, size = 0x12000, scoped, tag = 'internal scratch']
  %s0 = inlined_call_operand.vmem [shape: f32[8,128], index: 0, kind: input, shape index: {}]
  %s1 = inlined_call_operand.hbm [shape: bf16[128,128], index: 1, kind: input, shape index: {}]
  %s2 = inlined_call_operand.vmem [shape: f32[1,128], index: 2, kind: input, shape index: {}]
  %s3 = inlined_call_operand.hbm [shape: f32[8,128], index: 3, kind: output, shape index: {}]
  %s4 = sld [smem:[#allocation0]]
  $region34: #{testblock_forward.1} parent=0
    _
  %s6 = ssub.s32 1, %s4
  %s7 = scalar_select 0, %s6, %s4
  $region1: #{testblock_forward.1} parent=0
    #allocation2 [shape = 'u8[32768]{0}', space=vmem, size = 0x8000, scoped, tag = 'input window, operand 1, single buffered']
    #allocation3 [shape = 's32[1]{0}', space=sflag, size = 0x4, scoped, tag = 'scoped memory for testblock_forward.1']
    #allocation4 [shape = 's32[1]{0}', space=sflag, size = 0x4, scoped, tag = 'scoped memory for testblock_forward.1']
    #allocation5 [shape = 'u8[4096]{0}', space=vmem, size = 0x1000, scoped, tag = 'output window, operand 0, single buffered']
    %8 = vsyncpa [#allocation3], 0
    %9 = vsyncpa [#allocation4], 0
    // Predicated region
    $region2: #{testblock_forward.1} parent=1 // pred_check
      _
    $region3: #{testblock_forward.1} parent=1 // pred_check_branch
      %11 = sbr.rel (0) target = $region5
    $region4: #{testblock_forward.1} parent=1 // pred_region
      _
    $region5: #{testblock_forward.1} parent=1 // pred_fallthru
      _
    // Predicated region
    $region6: #{testblock_forward.1} parent=1 // pred_check
      _
    $region7: #{testblock_forward.1} parent=1 // pred_check_branch
      %13 = sbr.rel (0) target = $region9
    $region8: #{testblock_forward.1} parent=1 // pred_region
      %s15 = ssub.s32 1024, 1024
      %16 = vsyncadd [#allocation3], %s15
      %s17 = sshll.u32 [#allocation2], 4
      %s18 = int_to_ptr.vmem [resolvable:$true] %s17
      %23 = dma.hbm_to_vmem [thread:$0]  %s1, 1024, %s18, [#allocation3], 64, 64, 4
    $region9: #{testblock_forward.1} parent=1 // pred_fallthru
      _
    // Predicated region
    $region10: #{testblock_forward.1} parent=1 // pred_check
      _
    $region11: #{testblock_forward.1} parent=1 // pred_check_branch
      %25 = sbr.rel (0) target = $region13
    $region12: #{testblock_forward.1} parent=1 // pred_region
      _
    $region13: #{testblock_forward.1} parent=1 // pred_fallthru
      _
    // Predicated region
    $region14: #{testblock_forward.1} parent=1 // pred_check
      _
    $region15: #{testblock_forward.1} parent=1 // pred_check_branch
      %27 = sbr.rel (0) target = $region17
    $region16: #{testblock_forward.1} parent=1 // pred_region
      %28 = dma.done [#allocation3], 1024
    $region17: #{testblock_forward.1} parent=1 // pred_fallthru
      _
    %p30 = scmp.eq.s32.totalorder 0, 0
    // Predicated region
    $region18: #{testblock_forward.1} parent=1 // pred_check
      %p31 = pneg %p30
    $region19: #{testblock_forward.1} parent=1 // pred_check_branch
      %33 = sbr.rel (%p31) target = $region21
    $region20: #{testblock_forward.1} parent=1 // pred_region
      %v34 = vld [vmem:[%s2] sm:$0x1]
      %v36 = vlaneseq
      %v37 = vshrl.u32 %v36, 7
      %v38 = vsub.s32 0, %v37
      %v39 = vrot.slane %v34, %v38
      %41 = vst [vmem:[#allocation5] sm:$0xff] %v39
    $region21: #{testblock_forward.1} parent=1 // pred_fallthru
      _
    %v42 = vld [vmem:[#allocation5] sm:$0xff]
    %v43 = vld [vmem:[%s0] sm:$0xff]
    %v44 = vpack.c.bf16 %v43, %v43
    %v45 = vld [vmem:[#allocation2] sm:$0xf]
    %v46 = vld [vmem:[#allocation2 + $0x4] sm:$0xf]
    %v47 = vld [vmem:[#allocation2 + $0x8] sm:$0xf]
    %v48 = vld [vmem:[#allocation2 + $0xc] sm:$0xf]
    %v49 = vld [vmem:[#allocation2 + $0x10] sm:$0xf]
    %v50 = vld [vmem:[#allocation2 + $0x14] sm:$0xf]
    %v51 = vld [vmem:[#allocation2 + $0x18] sm:$0xf]
    %v52 = vld [vmem:[#allocation2 + $0x1c] sm:$0xf]
    %v53 = vld [vmem:[#allocation2 + $0x20] sm:$0xf]
    %v54 = vld [vmem:[#allocation2 + $0x24] sm:$0xf]
    %v55 = vld [vmem:[#allocation2 + $0x28] sm:$0xf]
    %v56 = vld [vmem:[#allocation2 + $0x2c] sm:$0xf]
    %v57 = vld [vmem:[#allocation2 + $0x30] sm:$0xf]
    %v58 = vld [vmem:[#allocation2 + $0x34] sm:$0xf]
    %v59 = vld [vmem:[#allocation2 + $0x38] sm:$0xf]
    %v60 = vld [vmem:[#allocation2 + $0x3c] sm:$0xf]
    %v77 = vunpack.c.l.b16 %v45
    %v78 = vunpack.c.l.b16 %v46
    %v79 = vunpack.c.l.b16 %v47
    %v80 = vunpack.c.l.b16 %v48
    %v81 = vunpack.c.l.b16 %v49
    %v82 = vunpack.c.l.b16 %v50
    %v83 = vunpack.c.l.b16 %v51
    %v84 = vunpack.c.l.b16 %v52
    %v85 = vunpack.c.l.b16 %v53
    %v86 = vunpack.c.l.b16 %v54
    %v87 = vunpack.c.l.b16 %v55
    %v88 = vunpack.c.l.b16 %v56
    %v89 = vunpack.c.l.b16 %v57
    %v90 = vunpack.c.l.b16 %v58
    %v91 = vunpack.c.l.b16 %v59
    %v92 = vunpack.c.l.b16 %v60
    %v93 = vpack.c.b16 %v78, %v77
    %v94 = vpack.c.b16 %v80, %v79
    %v95 = vpack.c.b16 %v82, %v81
    %v96 = vpack.c.b16 %v84, %v83
    %v97 = vpack.c.b16 %v86, %v85
    %v98 = vpack.c.b16 %v88, %v87
    %v99 = vpack.c.b16 %v90, %v89
    %v100 = vpack.c.b16 %v92, %v91
    %109 = vmatprep.subr.bf16.mxu0 0
    %110 = vmatpush1.bf16.msra.mxu0 %v93
    %111 = vmatprep.subr.bf16.mxu0 0
    %112 = vmatpush1.bf16.msra.mxu0 %v94
    %113 = vmatprep.subr.bf16.mxu0 0
    %114 = vmatpush1.bf16.msra.mxu0 %v95
    %115 = vmatprep.subr.bf16.mxu0 0
    %116 = vmatpush1.bf16.msra.mxu0 %v96
    %117 = vmatprep.subr.bf16.mxu0 0
    %118 = vmatpush1.bf16.msra.mxu0 %v97
    %119 = vmatprep.subr.bf16.mxu0 0
    %120 = vmatpush1.bf16.msra.mxu0 %v98
    %121 = vmatprep.subr.bf16.mxu0 0
    %122 = vmatpush1.bf16.msra.mxu0 %v99
    %123 = vmatprep.subr.bf16.mxu0 0
    %124 = vmatpush1.bf16.msra.mxu0 %v100
    %125 = vmatprep.subr.bf16.mxu0 0
    %126 = vmatpush1.bf16.msra.mxu0 0
    %127 = vmatprep.subr.bf16.mxu0 0
    %128 = vmatpush1.bf16.msra.mxu0 0
    %129 = vmatprep.subr.bf16.mxu0 0
    %130 = vmatpush1.bf16.msra.mxu0 0
    %131 = vmatprep.subr.bf16.mxu0 0
    %132 = vmatpush1.bf16.msra.mxu0 0
    %133 = vmatprep.subr.bf16.mxu0 0
    %134 = vmatpush1.bf16.msra.mxu0 0
    %135 = vmatprep.subr.bf16.mxu0 0
    %136 = vmatpush1.bf16.msra.mxu0 0
    %137 = vmatprep.subr.bf16.mxu0 0
    %138 = vmatpush1.bf16.msra.mxu0 0
    %139 = vmatprep.subr.bf16.mxu0 0
    %140 = vmatpush1.bf16.msra.mxu0 0
    %141 = vmatprep.mubr.bf16.mxu0 0
    %142 = vmatmul.mubr.bf16.gmra.mrb[0].mxu0 %v44
    %v143 = vpop.f32.mrb[0].mxu0
    %v144 = vadd.f32 0.0, %v143
    %v145 = vpop.f32.mrb[0].mxu0
    %v146 = vpop.f32.mrb[0].mxu0
    %v147 = vpop.f32.mrb[0].mxu0
    %148 = vdwg.mxu0
    %v149 = vadd.f32 %v42, %v144
    %150 = vst [vmem:[#allocation5] sm:$0xff] %v149
    // Predicated region
    $region22: #{testblock_forward.1} parent=1 // pred_check
      %p151 = pneg %p30
    $region23: #{testblock_forward.1} parent=1 // pred_check_branch
      %153 = sbr.rel (%p151) target = $region25
    $region24: #{testblock_forward.1} parent=1 // pred_region
      %v154 = vld [vmem:[#allocation5] sm:$0xff]
      %v155 = vmax.f32 %v154, 0.0
      %156 = vst [vmem:[#allocation5] sm:$0xff] %v155
    $region25: #{testblock_forward.1} parent=1 // pred_fallthru
      _
    // Predicated region
    $region26: #{testblock_forward.1} parent=1 // pred_check
      _
    $region27: #{testblock_forward.1} parent=1 // pred_check_branch
      %158 = sbr.rel (0) target = $region29
    $region28: #{testblock_forward.1} parent=1 // pred_region
      %s160 = ssub.s32 128, 128
      %161 = vsyncadd [#allocation4], %s160
      %s163 = sshll.u32 [#allocation5], 4
      %s164 = int_to_ptr.vmem [resolvable:$true] %s163
      %166 = dma.vmem_to_hbm [thread:$0]  %s164, 128, %s3, [#allocation4]
    $region29: #{testblock_forward.1} parent=1 // pred_fallthru
      _
    // Predicated region
    $region30: #{testblock_forward.1} parent=1 // pred_check
      _
    $region31: #{testblock_forward.1} parent=1 // pred_check_branch
      %168 = sbr.rel (0) target = $region33
    $region32: #{testblock_forward.1} parent=1 // pred_region
      %169 = dma.done [#allocation4], 128
    $region33: #{testblock_forward.1} parent=1 // pred_fallthru
      _
    %170 = vsyncpa [#allocation3], 1
    %171 = vsyncpa [#allocation4], 1

</llo_original>
